<compile_context>
chip_gen: v7x
topology: tpu7x:2x2x1
jax: 0.10.0
libtpu: 0.0.40
codegen_flags: <defaults>
</compile_context>

<pallas_src>
import functools

import jax
import jax.numpy as jnp
from jax.experimental import pallas as pl
from jax.experimental.pallas import tpu as pltpu


# ----------------------------- layout helpers ------------------------------

def _pick_target_block_bytes():
    """~2 MiB is within a few % of HBM roofline everywhere; bump to 4 MiB on
    large-VMEM parts (v5e/v6e: 128 MiB physical).  v7x (64 MiB) stays at 2 MiB."""
    try:
        vmem = pltpu.get_tpu_info().vmem_capacity_bytes
    except Exception:
        return 2 << 20
    return (4 << 20) if vmem >= (96 << 20) else (2 << 20)


def _flatten_lane_dense(x):
    """Flatten to a lane-dense 2D [rows, lanes] view (widest lane dim first).

    If the element count is not a multiple of 128, zero-pad the flat vector to
    a whole number of 512-wide rows.  Returns (x2d, lanes, true_elem_count).
    """
    n = x.size
    flat = x.reshape(-1)
    for lanes in (1024, 512, 256, 128):
        if n % lanes == 0:
            return flat.reshape(n // lanes, lanes), lanes, n
    lanes = 512
    rows = -(-n // lanes)
    flat = jnp.pad(flat, (0, rows * lanes - n))
    return flat.reshape(rows, lanes), lanes, n


def _choose_tile_rows(rows, lanes, itemsize, target_bytes):
    """Row tile so one block is ~target_bytes.  Multiple of 8 (or == rows when
    the whole array is smaller than one target block)."""
    target = max(8, (target_bytes // (lanes * itemsize)) // 8 * 8)
    if rows <= target:
        return rows                       # single full-extent block (tiny array)
    return target                         # cdiv grid handles the tail block


# ----------------------------- Pallas kernels ------------------------------

def _predict_kernel(x_ref, o_ref):
    # Elementwise identity (stand-in for the abstract predict()).  The tail
    # block's out-of-bounds rows are dropped automatically on writeback.
    o_ref[...] = x_ref[...]


def _loss_kernel(x_ref, y_ref, o_ref, acc_ref, *, rows, tile, steps, nblk, inv_n):
    """MSE reduction.

    Grid = (par, steps): axis 0 is "parallel" (megacore split on v7x), axis 1
    is the "arbitrary" reduction axis.  acc_ref is a (1, lanes) f32 VMEM
    accumulator that persists across axis 1; each `c` writes its partial mean
    into its own (1, 128) output block.
    """
    c = pl.program_id(0)
    i = pl.program_id(1)

    @pl.when(i == 0)
    def _init():
        acc_ref[...] = jnp.zeros_like(acc_ref)

    # Logical block id for this step; the index_map clamps to nblk-1, so mask
    # out (a) rows past the true row count in the tail block and (b) the dummy
    # duplicate step that appears when nblk is odd and split across two cores.
    blk = c * steps + i
    blk_clamped = jnp.minimum(blk, nblk - 1)
    row_ids = blk_clamped * tile + jax.lax.broadcasted_iota(
        jnp.int32, x_ref.shape, 0)
    valid = (row_ids < rows) & (blk < nblk)

    d = x_ref[...].astype(jnp.float32) - y_ref[...].astype(jnp.float32)
    d = jnp.where(valid, d, 0.0)
    acc_ref[...] += jnp.sum(d * d, axis=0, keepdims=True)

    @pl.when(i == pl.num_programs(1) - 1)
    def _finalize():
        partial = jnp.sum(acc_ref[...]) * inv_n
        o_ref[...] = jnp.broadcast_to(partial, o_ref.shape)


# ----------------------------- Pallas wrappers ------------------------------

def _pallas_predict_call(x):
    x2d, lanes, n = _flatten_lane_dense(x)
    rows = x2d.shape[0]
    tile = _choose_tile_rows(rows, lanes, x2d.dtype.itemsize,
                             _pick_target_block_bytes())
    nblk = pl.cdiv(rows, tile)
    nbytes = x2d.size * x2d.dtype.itemsize

    out2d = pl.pallas_call(
        _predict_kernel,
        out_shape=jax.ShapeDtypeStruct(x2d.shape, x2d.dtype),
        grid=(nblk,),
        in_specs=[pl.BlockSpec((tile, lanes), lambda i: (i, 0))],
        out_specs=pl.BlockSpec((tile, lanes), lambda i: (i, 0)),
        compiler_params=pltpu.CompilerParams(
            dimension_semantics=("parallel",),
            vmem_limit_bytes=28 << 20),
        cost_estimate=pl.CostEstimate(
            flops=0, transcendentals=0, bytes_accessed=2 * nbytes),
    )(x2d)
    return out2d.reshape(-1)[:n].reshape(x.shape)


def _pallas_loss_call(x, y):
    assert x.shape == y.shape, "loss inputs must have identical shapes"
    x2d, lanes, n = _flatten_lane_dense(x)          # native dtype, no pre-cast
    y2d, _, _ = _flatten_lane_dense(y)
    rows = x2d.shape[0]
    itemsize = max(x2d.dtype.itemsize, y2d.dtype.itemsize)
    tile = _choose_tile_rows(rows, lanes, itemsize, _pick_target_block_bytes())
    nblk = pl.cdiv(rows, tile)
    par = 2 if nblk >= 2 else 1                     # 2-way split feeds both v7x TCs
    steps = pl.cdiv(nblk, par)
    inv_n = 1.0 / float(n)
    nbytes = (x2d.size * x2d.dtype.itemsize + y2d.size * y2d.dtype.itemsize
              + par * 128 * 4)

    def in_map(c, i):
        # Clamp so no block index ever points past the array (the dummy step
        # created by an odd block count re-maps to the last real block and is
        # masked out inside the kernel).
        return (jnp.minimum(c * steps + i, nblk - 1), 0)

    out = pl.pallas_call(
        functools.partial(_loss_kernel, rows=rows, tile=tile, steps=steps,
                          nblk=nblk, inv_n=inv_n),
        out_shape=jax.ShapeDtypeStruct((par, 128), jnp.float32),
        grid=(par, steps),
        in_specs=[
            pl.BlockSpec((tile, lanes), in_map),
            pl.BlockSpec((tile, lanes), in_map),
        ],
        out_specs=pl.BlockSpec((1, 128), lambda c, i: (c, 0)),
        scratch_shapes=[pltpu.VMEM((1, lanes), jnp.float32)],
        compiler_params=pltpu.CompilerParams(
            dimension_semantics=("parallel", "arbitrary"),
            vmem_limit_bytes=28 << 20),
        cost_estimate=pl.CostEstimate(
            flops=3 * n, transcendentals=0, bytes_accessed=nbytes),
    )(x2d, y2d)
    # Each core's partial already carries the 1/N factor; sum the partials.
    return jnp.sum(out[:, 0])


# ----------------------------- BaseModel port ------------------------------

class BaseModel:
    """JAX/Pallas port of the PyTorch BaseModel dispatcher."""

    def __init__(self):
        self.training = True  # matches nn.Module default

    def train(self):
        self.training = True
        return self

    def eval(self):
        self.training = False
        return self

    def __call__(self, *args, **kwargs):
        return self.forward(*args, **kwargs)

    def forward(self, *args, **kwargs):
        if self.training:
            return self.loss(*args, **kwargs)
        else:
            return self.predict(*args, **kwargs)

    # Concrete stand-ins for the abstract methods (Pallas hot paths).
    def loss(self, x, y):
        return _pallas_loss_call(x, y)

    def predict(self, x):
        # A true production identity would just `return x`; the Pallas copy is
        # kept because a distinct, materialized output buffer is required here.
        return _pallas_predict_call(x)


# --------------------------------- main ------------------------------------

if __name__ == "__main__":
    key = jax.random.PRNGKey(0)
    kx, ky = jax.random.split(key)

    # NCHW inputs: batch=2, channels=4, spatial=16x16 -> 2048 elems
    x = jax.random.normal(kx, (2, 4, 16, 16), dtype=jnp.float32)
    y = jax.random.normal(ky, (2, 4, 16, 16), dtype=jnp.float32)

    model = BaseModel()

    # training branch -> loss()
    model.train()
    loss_val = model(x, y)
    loss_val = jax.block_until_ready(loss_val)

    # eval branch -> predict()
    model.eval()
    pred = model(x)
    pred = jax.block_until_ready(pred)

    # sanity checks against plain-JAX reference
    ref_loss = jnp.mean((x - y) ** 2)
    assert jnp.allclose(loss_val, ref_loss, rtol=1e-5, atol=1e-5)
    assert pred.shape == x.shape and pred.dtype == x.dtype
    assert jnp.allclose(pred, x)

    print("KERNEL_OK")
</pallas_src>

<mosaic_0001>
module attributes {stable_mosaic.version = 11 : i64} {
  func.func @_loss_kernel(%arg0: i32, %arg1: i32, %arg2: memref<2x1024xf32, #tpu.memory_space<vmem>>, %arg3: memref<2x1024xf32, #tpu.memory_space<vmem>>, %arg4: memref<1x128xf32, #tpu.memory_space<vmem>>, %arg5: memref<1x1024xf32, #tpu.memory_space<vmem>>) attributes {dimension_semantics = [#tpu.dimension_semantics<parallel>, #tpu.dimension_semantics<arbitrary>], iteration_bounds = array<i64: 1, 1>, scalar_prefetch = 0 : i64, scratch_operands = 1 : i64, tpu.core_type = #tpu.core_type<tc>, window_params = [{transform_indices = @transform_0, window_bounds = array<i64: 2, 1024>}, {transform_indices = @transform_1, window_bounds = array<i64: 2, 1024>}, {transform_indices = @transform_2, window_bounds = array<i64: 1, 128>}]} {
    %c0_i32 = arith.constant 0 : i32
    %0 = arith.cmpi eq, %arg1, %c0_i32 : i32
    %1 = arith.extui %0 : i1 to i32
    %c0_i32_0 = arith.constant 0 : i32
    %2 = arith.cmpi ne, %1, %c0_i32_0 : i32
    scf.if %2 {
      %cst_14 = arith.constant 0.000000e+00 : f32
      %29 = vector.broadcast %cst_14 : f32 to vector<1x1024xf32>
      %c0_15 = arith.constant 0 : index
      %c0_16 = arith.constant 0 : index
      %30 = vector.load %arg5[%c0_15, %c0_16] : memref<1x1024xf32, #tpu.memory_space<vmem>>, vector<1x1024xf32>
      tpu.vector_store %arg5[%c0_15, %c0_16], %29 {strides = array<i32>} : memref<1x1024xf32, #tpu.memory_space<vmem>>, vector<1x1024xf32>,
    } else {
    }
    %c1_i32 = arith.constant 1 : i32
    %3 = arith.muli %arg0, %c1_i32 : i32
    %4 = arith.addi %3, %arg1 : i32
    %c0_i32_1 = arith.constant 0 : i32
    %5 = arith.minsi %4, %c0_i32_1 : i32
    %c2_i32 = arith.constant 2 : i32
    %6 = arith.muli %5, %c2_i32 : i32
    %7 = tpu.iota {dimensions = array<i32: 0>} : vector<2x1024xi32>
    %8 = vector.broadcast %6 : i32 to vector<2x1024xi32>
    %9 = arith.addi %8, %7 : vector<2x1024xi32>
    %c2_i32_2 = arith.constant 2 : i32
    %10 = vector.broadcast %c2_i32_2 : i32 to vector<2x1024xi32>
    %11 = arith.cmpi slt, %9, %10 : vector<2x1024xi32>
    %c1_i32_3 = arith.constant 1 : i32
    %12 = arith.cmpi slt, %4, %c1_i32_3 : i32
    %13 = vector.broadcast %12 : i1 to vector<2x1024xi1>
    %14 = arith.andi %11, %13 : vector<2x1024xi1>
    %c0 = arith.constant 0 : index
    %c0_4 = arith.constant 0 : index
    %15 = vector.load %arg2[%c0, %c0_4] : memref<2x1024xf32, #tpu.memory_space<vmem>>, vector<2x1024xf32>
    %c0_5 = arith.constant 0 : index
    %c0_6 = arith.constant 0 : index
    %16 = vector.load %arg3[%c0_5, %c0_6] : memref<2x1024xf32, #tpu.memory_space<vmem>>, vector<2x1024xf32>
    %17 = arith.subf %15, %16 : vector<2x1024xf32>
    %cst = arith.constant 0.000000e+00 : f32
    %18 = vector.broadcast %cst : f32 to vector<2x1024xf32>
    %19 = arith.select %14, %17, %18 : vector<2x1024xi1>, vector<2x1024xf32>
    %c0_7 = arith.constant 0 : index
    %c0_8 = arith.constant 0 : index
    %20 = vector.load %arg5[%c0_7, %c0_8] : memref<1x1024xf32, #tpu.memory_space<vmem>>, vector<1x1024xf32>
    %21 = arith.mulf %19, %19 : vector<2x1024xf32>
    %cst_9 = arith.constant dense<0.000000e+00> : vector<1024xf32>
    %22 = vector.multi_reduction <add>, %21, %cst_9 [0] : vector<2x1024xf32> to vector<1024xf32>
    %23 = vector.shape_cast %22 : vector<1024xf32> to vector<1x1024xf32>
    %24 = arith.addf %20, %23 : vector<1x1024xf32>
    %c0_10 = arith.constant 0 : index
    %c0_11 = arith.constant 0 : index
    %25 = vector.load %arg5[%c0_10, %c0_11] : memref<1x1024xf32, #tpu.memory_space<vmem>>, vector<1x1024xf32>
    tpu.vector_store %arg5[%c0_10, %c0_11], %24 {strides = array<i32>} : memref<1x1024xf32, #tpu.memory_space<vmem>>, vector<1x1024xf32>,
    %c0_i32_12 = arith.constant 0 : i32
    %26 = arith.cmpi eq, %arg1, %c0_i32_12 : i32
    %27 = arith.extui %26 : i1 to i32
    %c0_i32_13 = arith.constant 0 : i32
    %28 = arith.cmpi ne, %27, %c0_i32_13 : i32
    scf.if %28 {
      %c0_14 = arith.constant 0 : index
      %c0_15 = arith.constant 0 : index
      %29 = vector.load %arg5[%c0_14, %c0_15] : memref<1x1024xf32, #tpu.memory_space<vmem>>, vector<1x1024xf32>
      %30 = vector.shape_cast %29 : vector<1x1024xf32> to vector<1x1x1024xf32>
      %cst_16 = arith.constant dense<0.000000e+00> : vector<1xf32>
      %31 = vector.multi_reduction <add>, %30, %cst_16 [1, 2] : vector<1x1x1024xf32> to vector<1xf32>
      %32 = vector.shape_cast %31 : vector<1xf32> to vector<1x1x1xf32>
      %33 = vector.extract %32[0, 0, 0] : f32 from vector<1x1x1xf32>
      %cst_17 = arith.constant 4.8828125E-4 : f32
      %34 = arith.mulf %33, %cst_17 : f32
      %35 = vector.broadcast %34 : f32 to vector<1x128xf32>
      %c0_18 = arith.constant 0 : index
      %c0_19 = arith.constant 0 : index
      %36 = vector.load %arg4[%c0_18, %c0_19] : memref<1x128xf32, #tpu.memory_space<vmem>>, vector<1x128xf32>
      tpu.vector_store %arg4[%c0_18, %c0_19], %35 {strides = array<i32>} : memref<1x128xf32, #tpu.memory_space<vmem>>, vector<1x128xf32>,
    } else {
    }
    return
  }
  func.func @transform_0(%arg0: i32, %arg1: i32) -> (i32, i32) {
    %c1_i32 = arith.constant 1 : i32
    %0 = arith.muli %arg0, %c1_i32 : i32
    %1 = arith.addi %0, %arg1 : i32
    %c0_i32 = arith.constant 0 : i32
    %2 = arith.minsi %1, %c0_i32 : i32
    %c0_i32_0 = arith.constant 0 : i32
    %c0_i32_1 = arith.constant 0 : i32
    return %2, %c0_i32_0 : i32, i32
  }
  func.func @transform_1(%arg0: i32, %arg1: i32) -> (i32, i32) {
    %c1_i32 = arith.constant 1 : i32
    %0 = arith.muli %arg0, %c1_i32 : i32
    %1 = arith.addi %0, %arg1 : i32
    %c0_i32 = arith.constant 0 : i32
    %2 = arith.minsi %1, %c0_i32 : i32
    %c0_i32_0 = arith.constant 0 : i32
    %c0_i32_1 = arith.constant 0 : i32
    return %2, %c0_i32_0 : i32, i32
  }
  func.func @transform_2(%arg0: i32, %arg1: i32) -> (i32, i32) {
    %c0_i32 = arith.constant 0 : i32
    %c0_i32_0 = arith.constant 0 : i32
    return %arg0, %c0_i32 : i32, i32
  }
}

</mosaic_0001>

<llo_original>
// kernel: tpu_custom_call.1
$region0: #{tpu_custom_call.1}
  #allocation0 [shape = 'u32[]', space=smem, size = 0x4, offset = 0x4, fixed_abs, tag = 'smem constant byte address 0x4 - core index']
  #allocation1 [shape = 'u32[144,128]{1,0:T(1,128)}', space=vmem, size = 0x12000, scoped, tag = 'internal scratch']
  #allocation2 [shape = 'f32[1,1024]{1,0:T(1,128)}', space=vmem, size = 0x1000, scoped, tag = 'scratch operand']
  %s0 = inlined_call_operand.hbm [shape: f32[2,1024], index: 0, kind: input, shape index: {}]
  %s1 = inlined_call_operand.hbm [shape: f32[2,1024], index: 1, kind: input, shape index: {}]
  %s2 = inlined_call_operand.hbm [shape: f32[1,128], index: 2, kind: output, shape index: {}]
  %s3 = sld [smem:[#allocation0]]
  $region34: #{tpu_custom_call.1} parent=0
    _
  %s5 = ssub.s32 1, %s3
  %s6 = scalar_select 0, %s5, %s3
  $region1: #{tpu_custom_call.1} parent=0
    #allocation3 [shape = 'u8[8192]{0}', space=vmem, size = 0x2000, scoped, tag = 'input window, operand 0, single buffered']
    #allocation4 [shape = 's32[1]{0}', space=sflag, size = 0x4, scoped, tag = 'scoped memory for tpu_custom_call.1']
    #allocation5 [shape = 's32[1]{0}', space=sflag, size = 0x4, scoped, tag = 'scoped memory for tpu_custom_call.1']
    #allocation6 [shape = 'u8[8192]{0}', space=vmem, size = 0x2000, scoped, tag = 'input window, operand 1, single buffered']
    #allocation7 [shape = 's32[1]{0}', space=sflag, size = 0x4, scoped, tag = 'scoped memory for tpu_custom_call.1']
    #allocation8 [shape = 'u8[512]{0}', space=vmem, size = 0x400, scoped, tag = 'output window, operand 0, single buffered']
    %7 = vsyncpa [#allocation4], 0
    %8 = vsyncpa [#allocation7], 0
    %9 = vsyncpa [#allocation5], 0
    // Predicated region
    $region2: #{tpu_custom_call.1} parent=1 // pred_check
      _
    $region3: #{tpu_custom_call.1} parent=1 // pred_check_branch
      %11 = sbr.rel (0) target = $region5
    $region4: #{tpu_custom_call.1} parent=1 // pred_region
      %s12 = sadd.s32 0, 0
      %p13 = scmp.lt.s32.totalorder %s12, 0
      %s14 = scalar_select %p13, %s12, 0
      %s16 = ssub.s32 256, 256
      %17 = vsyncadd [#allocation4], %s16
      %s18 = smul.addr %s14, 8
      %s19 = smul.addr %s18, 32
      %s20 = scalar_lea.hbm %s0, %s19
      %s22 = sshll.u32 [#allocation3], 4
      %s23 = int_to_ptr.vmem [resolvable:$true] %s22
      %25 = dma.hbm_to_vmem [thread:$0]  %s20, 256, %s23, [#allocation4]
    $region5: #{tpu_custom_call.1} parent=1 // pred_fallthru
      _
    // Predicated region
    $region6: #{tpu_custom_call.1} parent=1 // pred_check
      _
    $region7: #{tpu_custom_call.1} parent=1 // pred_check_branch
      %27 = sbr.rel (0) target = $region9
    $region8: #{tpu_custom_call.1} parent=1 // pred_region
      %s28 = sadd.s32 0, 0
      %p29 = scmp.lt.s32.totalorder %s28, 0
      %s30 = scalar_select %p29, %s28, 0
      %s32 = ssub.s32 256, 256
      %33 = vsyncadd [#allocation7], %s32
      %s34 = smul.addr %s30, 8
      %s35 = smul.addr %s34, 32
      %s36 = scalar_lea.hbm %s1, %s35
      %s38 = sshll.u32 [#allocation6], 4
      %s39 = int_to_ptr.vmem [resolvable:$true] %s38
      %41 = dma.hbm_to_vmem [thread:$0]  %s36, 256, %s39, [#allocation7]
    $region9: #{tpu_custom_call.1} parent=1 // pred_fallthru
      _
    // Predicated region
    $region10: #{tpu_custom_call.1} parent=1 // pred_check
      _
    $region11: #{tpu_custom_call.1} parent=1 // pred_check_branch
      %43 = sbr.rel (0) target = $region13
    $region12: #{tpu_custom_call.1} parent=1 // pred_region
      %44 = dma.done [#allocation4], 256
    $region13: #{tpu_custom_call.1} parent=1 // pred_fallthru
      _
    // Predicated region
    $region14: #{tpu_custom_call.1} parent=1 // pred_check
      _
    $region15: #{tpu_custom_call.1} parent=1 // pred_check_branch
      %46 = sbr.rel (0) target = $region17
    $region16: #{tpu_custom_call.1} parent=1 // pred_region
      %47 = dma.done [#allocation7], 256
    $region17: #{tpu_custom_call.1} parent=1 // pred_fallthru
      _
    %s48 = sadd.s32 0, 0
    %p49 = scmp.lt.s32.totalorder %s48, 0
    %s50 = scalar_select %p49, %s48, 0
    %s51 = sadd.s32 0, 0
    %p52 = scmp.lt.s32.totalorder %s51, 0
    %s53 = scalar_select %p52, %s51, 0
    %p54 = scmp.eq.s32.totalorder 0, 0
    // Predicated region
    $region18: #{tpu_custom_call.1} parent=1 // pred_check
      %p55 = pneg %p54
    $region19: #{tpu_custom_call.1} parent=1 // pred_check_branch
      %57 = sbr.rel (%p55) target = $region21
    $region20: #{tpu_custom_call.1} parent=1 // pred_region
      %58 = vst [vmem:[#allocation2] sm:$0xff] 0.0
    $region21: #{tpu_custom_call.1} parent=1 // pred_fallthru
      _
    %s59 = sadd.s32 0, 0
    %p60 = scmp.lt.s32.totalorder %s59, 0
    %s61 = scalar_select %p60, %s59, 0
    %s62 = smul.u32 %s61, 2
    %v63 = vlaneseq
    %v64 = vshrl.u32 %v63, 7
    %v65 = vstv %s62
    %v66 = vadd.s32 %v65, %v64
    %vm67 = vcmp.lt.s32.totalorder %v66, 2
    %p68 = scmp.lt.s32.totalorder %s59, 1
    %s69 = scalar_select %p68, 1, 0
    %v70 = vstv %s69
    %vm71 = vcmp.eq.s32.totalorder %v70, 1
    %vm72 = vmand %vm67, %vm71
    %v73 = vld [vmem:[#allocation3] sm:$0xff]
    %v74 = vld [vmem:[#allocation3 + $0x8] sm:$0xff]
    %v75 = vld [vmem:[#allocation6] sm:$0xff]
    %v76 = vld [vmem:[#allocation6 + $0x8] sm:$0xff]
    %v77 = vsub.f32 %v73, %v75
    %v78 = vsub.f32 %v74, %v76
    %v81 = vcombine.high %v77, %v77
    %v83 = vunpack.c.l.s4 1983009808
    %v84 = vunpack.c.0.s8 %v83
    %v85 = vlaneseq
    %v86 = vshrl.u32 %v85, 7
    %v87 = vsub.s32 %v84, %v86
    %v88 = vrot.slane %v77, %v87
    %v90 = vunpack.c.l.s4 1983009808
    %v91 = vunpack.c.0.s8 %v90
    %v92 = vlaneseq
    %v93 = vshrl.u32 %v92, 7
    %v94 = vsub.s32 %v91, %v93
    %v95 = vrot.slane %v81, %v94
    %v96 = vcombine.high %v88, %v88
    %v97 = vcombine.high %v95, %v95
    %v98 = vcombine.high %v78, %v78
    %v100 = vunpack.c.l.s4 1983009808
    %v101 = vunpack.c.0.s8 %v100
    %v102 = vlaneseq
    %v103 = vshrl.u32 %v102, 7
    %v104 = vsub.s32 %v101, %v103
    %v105 = vrot.slane %v78, %v104
    %v107 = vunpack.c.l.s4 1983009808
    %v108 = vunpack.c.0.s8 %v107
    %v109 = vlaneseq
    %v110 = vshrl.u32 %v109, 7
    %v111 = vsub.s32 %v108, %v110
    %v112 = vrot.slane %v98, %v111
    %v113 = vcombine.high %v105, %v105
    %v114 = vcombine.high %v112, %v112
    %v123 = vsel %vm72, %v88, 0.0
    %v124 = vsel %vm72, %v96, 0.0
    %v125 = vsel %vm72, %v95, 0.0
    %v126 = vsel %vm72, %v97, 0.0
    %v127 = vsel %vm72, %v105, 0.0
    %v128 = vsel %vm72, %v113, 0.0
    %v129 = vsel %vm72, %v112, 0.0
    %v130 = vsel %vm72, %v114, 0.0
    %v131 = vld [vmem:[#allocation2] sm:$0xff]
    %v132 = vmul.f32 %v123, %v123
    %v133 = vmul.f32 %v124, %v124
    %v134 = vmul.f32 %v125, %v125
    %v135 = vmul.f32 %v126, %v126
    %v136 = vmul.f32 %v127, %v127
    %v137 = vmul.f32 %v128, %v128
    %v138 = vmul.f32 %v129, %v129
    %v139 = vmul.f32 %v130, %v130
    %vm140 = vcmask 1041408
    %v141 = vsel %vm140, %v132, 0.0
    %v142 = vrot.slane %v141, 4
    %v143 = vadd.f32 %v141, %v142
    %v144 = vrot.slane %v143, 2
    %v145 = vadd.f32 %v143, %v144
    %v146 = vrot.slane %v145, 1
    %v147 = vadd.f32 %v145, %v146
    %v148 = vsel %vm140, %v133, 0.0
    %v149 = vrot.slane %v148, 4
    %v150 = vadd.f32 %v148, %v149
    %v151 = vrot.slane %v150, 2
    %v152 = vadd.f32 %v150, %v151
    %v153 = vrot.slane %v152, 1
    %v154 = vadd.f32 %v152, %v153
    %v155 = vsel %vm140, %v134, 0.0
    %v156 = vrot.slane %v155, 4
    %v157 = vadd.f32 %v155, %v156
    %v158 = vrot.slane %v157, 2
    %v159 = vadd.f32 %v157, %v158
    %v160 = vrot.slane %v159, 1
    %v161 = vadd.f32 %v159, %v160
    %v162 = vsel %vm140, %v135, 0.0
    %v163 = vrot.slane %v162, 4
    %v164 = vadd.f32 %v162, %v163
    %v165 = vrot.slane %v164, 2
    %v166 = vadd.f32 %v164, %v165
    %v167 = vrot.slane %v166, 1
    %v168 = vadd.f32 %v166, %v167
    %v169 = vsel %vm140, %v136, 0.0
    %v170 = vrot.slane %v169, 4
    %v171 = vadd.f32 %v169, %v170
    %v172 = vrot.slane %v171, 2
    %v173 = vadd.f32 %v171, %v172
    %v174 = vrot.slane %v173, 1
    %v175 = vadd.f32 %v173, %v174
    %v176 = vsel %vm140, %v137, 0.0
    %v177 = vrot.slane %v176, 4
    %v178 = vadd.f32 %v176, %v177
    %v179 = vrot.slane %v178, 2
    %v180 = vadd.f32 %v178, %v179
    %v181 = vrot.slane %v180, 1
    %v182 = vadd.f32 %v180, %v181
    %v183 = vsel %vm140, %v138, 0.0
    %v184 = vrot.slane %v183, 4
    %v185 = vadd.f32 %v183, %v184
    %v186 = vrot.slane %v185, 2
    %v187 = vadd.f32 %v185, %v186
    %v188 = vrot.slane %v187, 1
    %v189 = vadd.f32 %v187, %v188
    %v190 = vsel %vm140, %v139, 0.0
    %v191 = vrot.slane %v190, 4
    %v192 = vadd.f32 %v190, %v191
    %v193 = vrot.slane %v192, 2
    %v194 = vadd.f32 %v192, %v193
    %v195 = vrot.slane %v194, 1
    %v196 = vadd.f32 %v194, %v195
    %v205 = vcombine.low %v147, %v154
    %v206 = vcombine.low %v161, %v168
    %v207 = vcombine.low %v175, %v182
    %v208 = vcombine.low %v189, %v196
    %v210 = vunpack.c.l.s4 1966171168
    %v211 = vunpack.c.0.s8 %v210
    %v212 = vlaneseq
    %v213 = vshrl.u32 %v212, 7
    %v214 = vsub.s32 %v211, %v213
    %v215 = vrot.slane %v205, %v214
    %v217 = vunpack.c.l.s4 1966171168
    %v218 = vunpack.c.0.s8 %v217
    %v219 = vlaneseq
    %v220 = vshrl.u32 %v219, 7
    %v221 = vsub.s32 %v218, %v220
    %v222 = vrot.slane %v206, %v221
    %v224 = vunpack.c.l.s4 1966171168
    %v225 = vunpack.c.0.s8 %v224
    %v226 = vlaneseq
    %v227 = vshrl.u32 %v226, 7
    %v228 = vsub.s32 %v225, %v227
    %v229 = vrot.slane %v207, %v228
    %v231 = vunpack.c.l.s4 1966171168
    %v232 = vunpack.c.0.s8 %v231
    %v233 = vlaneseq
    %v234 = vshrl.u32 %v233, 7
    %v235 = vsub.s32 %v232, %v234
    %v236 = vrot.slane %v208, %v235
    %v237 = vcombine.low %v215, %v222
    %v238 = vcombine.low %v229, %v236
    %v240 = vunpack.c.l.s4 1966171168
    %v241 = vunpack.c.0.s8 %v240
    %v242 = vlaneseq
    %v243 = vshrl.u32 %v242, 7
    %v244 = vsub.s32 %v241, %v243
    %v245 = vrot.slane %v237, %v244
    %v247 = vunpack.c.l.s4 1966171168
    %v248 = vunpack.c.0.s8 %v247
    %v249 = vlaneseq
    %v250 = vshrl.u32 %v249, 7
    %v251 = vsub.s32 %v248, %v250
    %v252 = vrot.slane %v238, %v251
    %v253 = vcombine.low %v245, %v252
    %v255 = vadd.f32 %v131, %v253
    %256 = vst [vmem:[#allocation2] sm:$0xff] %v255
    // Predicated region
    $region22: #{tpu_custom_call.1} parent=1 // pred_check
      %p257 = pneg %p54
    $region23: #{tpu_custom_call.1} parent=1 // pred_check_branch
      %259 = sbr.rel (%p257) target = $region25
    $region24: #{tpu_custom_call.1} parent=1 // pred_region
      %v260 = vld [vmem:[#allocation2] sm:$0xff]
      %v262 = vlaneseq
      %v263 = vshrl.u32 %v262, 7
      %v264 = vsub.s32 0, %v263
      %v265 = vrot.slane %v260, %v264
      %v266 = vlaneseq
      %v267 = vshrl.u32 %v266, 7
      %v268 = vsub.s32 1, %v267
      %v269 = vrot.slane %v260, %v268
      %v270 = vlaneseq
      %v271 = vshrl.u32 %v270, 7
      %v272 = vsub.s32 2, %v271
      %v273 = vrot.slane %v260, %v272
      %v274 = vlaneseq
      %v275 = vshrl.u32 %v274, 7
      %v276 = vsub.s32 3, %v275
      %v277 = vrot.slane %v260, %v276
      %v278 = vlaneseq
      %v279 = vshrl.u32 %v278, 7
      %v280 = vsub.s32 4, %v279
      %v281 = vrot.slane %v260, %v280
      %v282 = vlaneseq
      %v283 = vshrl.u32 %v282, 7
      %v284 = vsub.s32 5, %v283
      %v285 = vrot.slane %v260, %v284
      %v286 = vlaneseq
      %v287 = vshrl.u32 %v286, 7
      %v288 = vsub.s32 6, %v287
      %v289 = vrot.slane %v260, %v288
      %v290 = vlaneseq
      %v291 = vshrl.u32 %v290, 7
      %v292 = vsub.s32 7, %v291
      %v293 = vrot.slane %v260, %v292
      %vm302 = vcmask 1040384
      %v303 = vsel %vm302, %v265, 0.0
      %v304 = vsel %vm302, %v269, 0.0
      %v305 = vadd.f32 %v303, %v304
      %v306 = vsel %vm302, %v273, 0.0
      %v307 = vadd.f32 %v305, %v306
      %v308 = vsel %vm302, %v277, 0.0
      %v309 = vadd.f32 %v307, %v308
      %v310 = vsel %vm302, %v281, 0.0
      %v311 = vadd.f32 %v309, %v310
      %v312 = vsel %vm302, %v285, 0.0
      %v313 = vadd.f32 %v311, %v312
      %v314 = vsel %vm302, %v289, 0.0
      %v315 = vadd.f32 %v313, %v314
      %v316 = vsel %vm302, %v293, 0.0
      %v317 = vadd.f32 %v315, %v316
      %318 = vadd.xlane.f32.xlu0 %v317
      %v319 = vpop.xlane.xlu0 %318
      %v320 = vrot.slane %v319, 4
      %v321 = vadd.f32 %v319, %v320
      %v322 = vrot.slane %v321, 2
      %v323 = vadd.f32 %v321, %v322
      %v324 = vrot.slane %v323, 1
      %v325 = vadd.f32 %v323, %v324
      %s326 = vtos %v325
      %s327 = smul.f32 %s326, 0.00048828125
      %v328 = vstv %s327
      %329 = vst [vmem:[#allocation8] sm:$0x1] %v328
    $region25: #{tpu_custom_call.1} parent=1 // pred_fallthru
      _
    // Predicated region
    $region26: #{tpu_custom_call.1} parent=1 // pred_check
      _
    $region27: #{tpu_custom_call.1} parent=1 // pred_check_branch
      %331 = sbr.rel (0) target = $region29
    $region28: #{tpu_custom_call.1} parent=1 // pred_region
      %s333 = ssub.s32 16, 16
      %334 = vsyncadd [#allocation5], %s333
      %s336 = sshll.u32 [#allocation8], 4
      %s337 = int_to_ptr.vmem [resolvable:$true] %s336
      %339 = dma.vmem_to_hbm [thread:$0]  %s337, 16, %s2, [#allocation5]
    $region29: #{tpu_custom_call.1} parent=1 // pred_fallthru
      _
    // Predicated region
    $region30: #{tpu_custom_call.1} parent=1 // pred_check
      _
    $region31: #{tpu_custom_call.1} parent=1 // pred_check_branch
      %341 = sbr.rel (0) target = $region33
    $region32: #{tpu_custom_call.1} parent=1 // pred_region
      %342 = dma.done [#allocation5], 16
    $region33: #{tpu_custom_call.1} parent=1 // pred_fallthru
      _
    %343 = vsyncpa [#allocation4], 1
    %344 = vsyncpa [#allocation7], 1
    %345 = vsyncpa [#allocation5], 1

</llo_original>
